<compile_context>
chip_gen: v6e
topology: v6e:2x2x1
jax: 0.10.0
libtpu: 0.0.40
codegen_flags: <defaults>
</compile_context>

<pallas_src>
import jax
import jax.numpy as jnp
from jax.experimental import pallas as pl
from jax.experimental.pallas import tpu as pltpu

_LANES = 128
_MAX_BLOCK_ROWS = 2048   # (2048, 128) f32 block = 1 MiB per input per buffer
_N_OUTER = 2             # outer "parallel" axis -> 2 TCs on v7x, serial elsewhere


def _dice_kernel(p_ref, t_ref, pt_out_ref, ps_out_ref, acc_pt, acc_ps):
    k = pl.program_id(1)

    @pl.when(k == 0)
    def _():
        acc_pt[...] = jnp.zeros_like(acc_pt)
        acc_ps[...] = jnp.zeros_like(acc_ps)

    p = p_ref[...]
    t = t_ref[...]
    # Pure VPU element-wise accumulation; pipelines freely under the input DMA.
    acc_pt[...] += p * t
    acc_ps[...] += p + t

    @pl.when(k == pl.num_programs(1) - 1)
    def _():
        # One full cross-lane reduction per outer slice, only at the end of
        # its sweep.  Broadcast the scalar across a dense (8, 128) tile so the
        # output store is unmasked; the wrapper reads element [0, 0].
        zeros = jnp.zeros((8, _LANES), jnp.float32)
        pt_out_ref[...] = zeros + jnp.sum(acc_pt[...])
        ps_out_ref[...] = zeros + jnp.sum(acc_ps[...])


def dice_loss(y_pred, y_true):
    """1 - (2*sum(p*t) + 1) / (sum(p) + sum(t) + 1), reduced over all elements."""
    assert y_pred.shape == y_true.shape
    total = y_pred.size

    # Upcast to f32 (no-op for f32 inputs); zero padding is neutral for all sums.
    p = jnp.ravel(y_pred).astype(jnp.float32)
    t = jnp.ravel(y_true).astype(jnp.float32)

    rows = max(1, (total + _LANES - 1) // _LANES)
    block_rows = min(_MAX_BLOCK_ROWS, ((rows + 7) // 8) * 8)
    chunk = block_rows * _N_OUTER
    padded_rows = ((rows + chunk - 1) // chunk) * chunk
    pad = padded_rows * _LANES - total
    if pad:
        p = jnp.pad(p, (0, pad))
        t = jnp.pad(t, (0, pad))
    p2 = p.reshape(padded_rows, _LANES)
    t2 = t.reshape(padded_rows, _LANES)

    n_inner = padded_rows // chunk  # row-blocks per outer slice

    in_spec = pl.BlockSpec((block_rows, _LANES),
                           lambda j, k: (j * n_inner + k, 0))
    out_spec = pl.BlockSpec((8, _LANES), lambda j, k: (j, 0))

    out_pt, out_ps = pl.pallas_call(
        _dice_kernel,
        out_shape=(
            jax.ShapeDtypeStruct((_N_OUTER * 8, _LANES), jnp.float32),
            jax.ShapeDtypeStruct((_N_OUTER * 8, _LANES), jnp.float32),
        ),
        grid_spec=pltpu.PrefetchScalarGridSpec(
            num_scalar_prefetch=0,
            grid=(_N_OUTER, n_inner),
            in_specs=[in_spec, in_spec],
            out_specs=[out_spec, out_spec],
            scratch_shapes=[
                pltpu.VMEM((block_rows, _LANES), jnp.float32),  # sum(p * t)
                pltpu.VMEM((block_rows, _LANES), jnp.float32),  # sum(p + t)
            ],
        ),
        compiler_params=pltpu.CompilerParams(
            dimension_semantics=("parallel", "arbitrary"),
        ),
        cost_estimate=pl.CostEstimate(
            flops=3 * total,
            transcendentals=0,
            bytes_accessed=2 * total * 4,
        ),
    )(p2, t2)

    # Each outer slice replicated its scalar partial across one (8,128) tile.
    sum_pt = out_pt[0, 0] + out_pt[8, 0]
    sum_ps = out_ps[0, 0] + out_ps[8, 0]
    return 1.0 - (2.0 * sum_pt + 1.0) / (sum_ps + 1.0)


if __name__ == "__main__":
    key = jax.random.PRNGKey(0)
    k1, k2 = jax.random.split(key)
    # NCHW, as the PyTorch module would receive: batch=2, channels=4, 16x16.
    shape = (2, 4, 16, 16)
    y_pred = jax.nn.sigmoid(jax.random.normal(k1, shape, dtype=jnp.float32))
    y_true = (jax.random.uniform(k2, shape) > 0.5).astype(jnp.float32)

    loss_fn = jax.jit(dice_loss)
    loss = jax.block_until_ready(loss_fn(y_pred, y_true))

    # Reference check (plain JAX).
    upper = 2.0 * jnp.sum(y_pred * y_true) + 1.0
    lower = jnp.sum(y_pred) + jnp.sum(y_true) + 1.0
    ref = 1.0 - upper / lower
    assert jnp.allclose(loss, ref, rtol=1e-5, atol=1e-6), (loss, ref)

    print("KERNEL_OK")
</pallas_src>

<mosaic_0001>
module attributes {stable_mosaic.version = 11 : i64} {
  func.func @_dice_kernel(%arg0: i32, %arg1: i32, %arg2: memref<16x128xf32, #tpu.memory_space<vmem>>, %arg3: memref<16x128xf32, #tpu.memory_space<vmem>>, %arg4: memref<8x128xf32, #tpu.memory_space<vmem>>, %arg5: memref<8x128xf32, #tpu.memory_space<vmem>>, %arg6: memref<16x128xf32, #tpu.memory_space<vmem>>, %arg7: memref<16x128xf32, #tpu.memory_space<vmem>>) attributes {dimension_semantics = [#tpu.dimension_semantics<parallel>, #tpu.dimension_semantics<arbitrary>], iteration_bounds = array<i64: 2, 1>, scalar_prefetch = 0 : i64, scratch_operands = 2 : i64, tpu.core_type = #tpu.core_type<tc>, window_params = [{transform_indices = @transform_0, window_bounds = array<i64: 16, 128>}, {transform_indices = @transform_1, window_bounds = array<i64: 16, 128>}, {transform_indices = @transform_2, window_bounds = array<i64: 8, 128>}, {transform_indices = @transform_3, window_bounds = array<i64: 8, 128>}]} {
    %c0_i32 = arith.constant 0 : i32
    %0 = arith.cmpi eq, %arg1, %c0_i32 : i32
    %1 = arith.extui %0 : i1 to i32
    %c0_i32_0 = arith.constant 0 : i32
    %2 = arith.cmpi ne, %1, %c0_i32_0 : i32
    scf.if %2 {
      %cst = arith.constant 0.000000e+00 : f32
      %16 = vector.broadcast %cst : f32 to vector<16x128xf32>
      %c0_14 = arith.constant 0 : index
      %c0_15 = arith.constant 0 : index
      %17 = vector.load %arg6[%c0_14, %c0_15] : memref<16x128xf32, #tpu.memory_space<vmem>>, vector<16x128xf32>
      tpu.vector_store %arg6[%c0_14, %c0_15], %16 {strides = array<i32>} : memref<16x128xf32, #tpu.memory_space<vmem>>, vector<16x128xf32>,
      %cst_16 = arith.constant 0.000000e+00 : f32
      %18 = vector.broadcast %cst_16 : f32 to vector<16x128xf32>
      %c0_17 = arith.constant 0 : index
      %c0_18 = arith.constant 0 : index
      %19 = vector.load %arg7[%c0_17, %c0_18] : memref<16x128xf32, #tpu.memory_space<vmem>>, vector<16x128xf32>
      tpu.vector_store %arg7[%c0_17, %c0_18], %18 {strides = array<i32>} : memref<16x128xf32, #tpu.memory_space<vmem>>, vector<16x128xf32>,
    } else {
    }
    %c0 = arith.constant 0 : index
    %c0_1 = arith.constant 0 : index
    %3 = vector.load %arg2[%c0, %c0_1] : memref<16x128xf32, #tpu.memory_space<vmem>>, vector<16x128xf32>
    %c0_2 = arith.constant 0 : index
    %c0_3 = arith.constant 0 : index
    %4 = vector.load %arg3[%c0_2, %c0_3] : memref<16x128xf32, #tpu.memory_space<vmem>>, vector<16x128xf32>
    %c0_4 = arith.constant 0 : index
    %c0_5 = arith.constant 0 : index
    %5 = vector.load %arg6[%c0_4, %c0_5] : memref<16x128xf32, #tpu.memory_space<vmem>>, vector<16x128xf32>
    %6 = arith.mulf %3, %4 : vector<16x128xf32>
    %7 = arith.addf %5, %6 : vector<16x128xf32>
    %c0_6 = arith.constant 0 : index
    %c0_7 = arith.constant 0 : index
    %8 = vector.load %arg6[%c0_6, %c0_7] : memref<16x128xf32, #tpu.memory_space<vmem>>, vector<16x128xf32>
    tpu.vector_store %arg6[%c0_6, %c0_7], %7 {strides = array<i32>} : memref<16x128xf32, #tpu.memory_space<vmem>>, vector<16x128xf32>,
    %c0_8 = arith.constant 0 : index
    %c0_9 = arith.constant 0 : index
    %9 = vector.load %arg7[%c0_8, %c0_9] : memref<16x128xf32, #tpu.memory_space<vmem>>, vector<16x128xf32>
    %10 = arith.addf %3, %4 : vector<16x128xf32>
    %11 = arith.addf %9, %10 : vector<16x128xf32>
    %c0_10 = arith.constant 0 : index
    %c0_11 = arith.constant 0 : index
    %12 = vector.load %arg7[%c0_10, %c0_11] : memref<16x128xf32, #tpu.memory_space<vmem>>, vector<16x128xf32>
    tpu.vector_store %arg7[%c0_10, %c0_11], %11 {strides = array<i32>} : memref<16x128xf32, #tpu.memory_space<vmem>>, vector<16x128xf32>,
    %c0_i32_12 = arith.constant 0 : i32
    %13 = arith.cmpi eq, %arg1, %c0_i32_12 : i32
    %14 = arith.extui %13 : i1 to i32
    %c0_i32_13 = arith.constant 0 : i32
    %15 = arith.cmpi ne, %14, %c0_i32_13 : i32
    scf.if %15 {
      %cst = arith.constant 0.000000e+00 : f32
      %16 = vector.broadcast %cst : f32 to vector<8x128xf32>
      %c0_14 = arith.constant 0 : index
      %c0_15 = arith.constant 0 : index
      %17 = vector.load %arg6[%c0_14, %c0_15] : memref<16x128xf32, #tpu.memory_space<vmem>>, vector<16x128xf32>
      %18 = vector.shape_cast %17 : vector<16x128xf32> to vector<1x16x128xf32>
      %cst_16 = arith.constant dense<0.000000e+00> : vector<1xf32>
      %19 = vector.multi_reduction <add>, %18, %cst_16 [1, 2] : vector<1x16x128xf32> to vector<1xf32>
      %20 = vector.shape_cast %19 : vector<1xf32> to vector<1x1x1xf32>
      %21 = vector.extract %20[0, 0, 0] : f32 from vector<1x1x1xf32>
      %22 = vector.broadcast %21 : f32 to vector<8x128xf32>
      %23 = arith.addf %16, %22 : vector<8x128xf32>
      %c0_17 = arith.constant 0 : index
      %c0_18 = arith.constant 0 : index
      %24 = vector.load %arg4[%c0_17, %c0_18] : memref<8x128xf32, #tpu.memory_space<vmem>>, vector<8x128xf32>
      tpu.vector_store %arg4[%c0_17, %c0_18], %23 {strides = array<i32>} : memref<8x128xf32, #tpu.memory_space<vmem>>, vector<8x128xf32>,
      %c0_19 = arith.constant 0 : index
      %c0_20 = arith.constant 0 : index
      %25 = vector.load %arg7[%c0_19, %c0_20] : memref<16x128xf32, #tpu.memory_space<vmem>>, vector<16x128xf32>
      %26 = vector.shape_cast %25 : vector<16x128xf32> to vector<1x16x128xf32>
      %cst_21 = arith.constant dense<0.000000e+00> : vector<1xf32>
      %27 = vector.multi_reduction <add>, %26, %cst_21 [1, 2] : vector<1x16x128xf32> to vector<1xf32>
      %28 = vector.shape_cast %27 : vector<1xf32> to vector<1x1x1xf32>
      %29 = vector.extract %28[0, 0, 0] : f32 from vector<1x1x1xf32>
      %30 = vector.broadcast %29 : f32 to vector<8x128xf32>
      %31 = arith.addf %16, %30 : vector<8x128xf32>
      %c0_22 = arith.constant 0 : index
      %c0_23 = arith.constant 0 : index
      %32 = vector.load %arg5[%c0_22, %c0_23] : memref<8x128xf32, #tpu.memory_space<vmem>>, vector<8x128xf32>
      tpu.vector_store %arg5[%c0_22, %c0_23], %31 {strides = array<i32>} : memref<8x128xf32, #tpu.memory_space<vmem>>, vector<8x128xf32>,
    } else {
    }
    return
  }
  func.func @transform_0(%arg0: i32, %arg1: i32) -> (i32, i32) {
    %c1_i32 = arith.constant 1 : i32
    %0 = arith.muli %arg0, %c1_i32 : i32
    %1 = arith.addi %0, %arg1 : i32
    %c0_i32 = arith.constant 0 : i32
    %c0_i32_0 = arith.constant 0 : i32
    return %1, %c0_i32 : i32, i32
  }
  func.func @transform_1(%arg0: i32, %arg1: i32) -> (i32, i32) {
    %c1_i32 = arith.constant 1 : i32
    %0 = arith.muli %arg0, %c1_i32 : i32
    %1 = arith.addi %0, %arg1 : i32
    %c0_i32 = arith.constant 0 : i32
    %c0_i32_0 = arith.constant 0 : i32
    return %1, %c0_i32 : i32, i32
  }
  func.func @transform_2(%arg0: i32, %arg1: i32) -> (i32, i32) {
    %c0_i32 = arith.constant 0 : i32
    %c0_i32_0 = arith.constant 0 : i32
    return %arg0, %c0_i32 : i32, i32
  }
  func.func @transform_3(%arg0: i32, %arg1: i32) -> (i32, i32) {
    %c0_i32 = arith.constant 0 : i32
    %c0_i32_0 = arith.constant 0 : i32
    return %arg0, %c0_i32 : i32, i32
  }
}

</mosaic_0001>

<llo_original>
// kernel: dice_loss.1
$region0: #{dice_loss.1}
  #allocation0 [shape = 'u32[]', space=smem, size = 0x4, offset = 0x4, fixed_abs, tag = 'smem constant byte address 0x4 - core index']
  #allocation1 [shape = 'u32[144,128]{1,0:T(1,128)}', space=vmem, size = 0x12000, scoped, tag = 'internal scratch']
  #allocation2 [shape = 'f32[16,128]{1,0:T(8,128)}', space=vmem, size = 0x2000, scoped, tag = 'scratch operand']
  #allocation3 [shape = 'f32[16,128]{1,0:T(8,128)}', space=vmem, size = 0x2000, scoped, tag = 'scratch operand']
  %s0 = inlined_call_operand.vmem [shape: f32[32,128], index: 0, kind: input, shape index: {}]
  %s1 = inlined_call_operand.vmem [shape: f32[32,128], index: 1, kind: input, shape index: {}]
  %s2 = inlined_call_operand.vmem [shape: f32[16,128], index: 2, kind: output, shape index: {0}]
  %s3 = inlined_call_operand.vmem [shape: f32[16,128], index: 3, kind: output, shape index: {1}]
  %4 = xla_tuple %s2, %s3
  %s5 = sld [smem:[#allocation0]]
  $region57: #{dice_loss.1} parent=0
    _
  %s7 = ssub.s32 1, %s5
  %s8 = scalar_select 0, %s7, %s5
  loop: start=0, step=1, limit=4
  $region2: #{dice_loss.1} parent=0 // loop_pre_header
    _
  $region3: #{dice_loss.1} parent=0 // loop_header
    %s10 = sphi 0, %s14
    %p11 = scmp.ge.s32.totalorder %s10, 4
    %s17 = sphi 0, %s29
    %s18 = sphi 0, %s25
    %s19 = sphi 0, %s17
    %s20 = sphi 0, %s18
    %s21 = sphi 0, %s19
    %s22 = sphi 0, %s20
    %s34 = sphi 0, %s36
    %s37 = sphi 0, %s34
    %s38 = sphi 0, %s37
    %s54 = sphi 0, %s38
    %s62 = sphi 0, %s64
    %s65 = sphi 0, %s62
    %s66 = sphi 0, %s65
    %s82 = sphi 0, %s66
    %s88 = sphi 0, %s90
    %s91 = sphi 0, %s88
    %s92 = sphi 0, %s91
    %s108 = sphi 0, %s92
    %s114 = sphi 0, %s116
    %s117 = sphi 0, %s114
    %s118 = sphi 0, %s117
    %s134 = sphi 0, %s118
  $region4: #{dice_loss.1} parent=0 // loop_header_branch
    %13 = sbr.rel (%p11) target = $region8
  $region5: #{dice_loss.1} parent=0 // loop_body
    %s15 = ssub.s32 %s10, 1
    %s16 = ssub.s32 %s10, 2
    %s23 = sadd.s32 1, %s18
    %p24 = scmp.ge.s32.totalorder %s23, 1
    %s25 = scalar_select %p24, 0, %s23
    %s26 = sadd.s32 1, %s17
    %s27 = scalar_select %p24, %s26, %s17
    %p28 = scmp.ge.s32.totalorder %s27, 2
    %s29 = scalar_select %p28, 0, %s27
    %s30 = sadd.s32 %s17, %s18
    %s31 = sadd.s32 %s29, %s25
    %s32 = ssub.s32 %s30, %s31
    %p33 = scmp.eq.s32.totalorder %s32, 0
    %s35 = sadd.s32 %s34, 1
    %s36 = scalar_select %p33, %s34, %s35
    %p39 = pneg %p33
    %p40 = scmp.eq.s32.totalorder %s10, 1
    %p41 = por %p39, %p40
    %p42 = scmp.ne.s32.totalorder %s34, %s37
    %p43 = scmp.eq.s32.totalorder %s10, 0
    %p44 = por %p42, %p43
    %p45 = scmp.ne.s32.totalorder %s34, %s37
    %p46 = scmp.eq.s32.totalorder %s15, 1
    %p47 = por %p45, %p46
    %p48 = scmp.ne.s32.totalorder %s37, %s38
    %p49 = scmp.eq.s32.totalorder %s15, 0
    %p50 = por %p48, %p49
    %p51 = scmp.ne.s32.totalorder %s37, %s38
    %p52 = scmp.eq.s32.totalorder %s16, 1
    %p53 = por %p51, %p52
    %p55 = scmp.ne.s32.totalorder %s38, %s54
    %p56 = scmp.eq.s32.totalorder %s16, 0
    %p57 = por %p55, %p56
    %s58 = sadd.s32 %s17, %s18
    %s59 = sadd.s32 %s29, %s25
    %s60 = ssub.s32 %s58, %s59
    %p61 = scmp.eq.s32.totalorder %s60, 0
    %s63 = sadd.s32 %s62, 1
    %s64 = scalar_select %p61, %s62, %s63
    %p67 = pneg %p61
    %p68 = scmp.eq.s32.totalorder %s10, 1
    %p69 = por %p67, %p68
    %p70 = scmp.ne.s32.totalorder %s62, %s65
    %p71 = scmp.eq.s32.totalorder %s10, 0
    %p72 = por %p70, %p71
    %p73 = scmp.ne.s32.totalorder %s62, %s65
    %p74 = scmp.eq.s32.totalorder %s15, 1
    %p75 = por %p73, %p74
    %p76 = scmp.ne.s32.totalorder %s65, %s66
    %p77 = scmp.eq.s32.totalorder %s15, 0
    %p78 = por %p76, %p77
    %p79 = scmp.ne.s32.totalorder %s65, %s66
    %p80 = scmp.eq.s32.totalorder %s16, 1
    %p81 = por %p79, %p80
    %p83 = scmp.ne.s32.totalorder %s66, %s82
    %p84 = scmp.eq.s32.totalorder %s16, 0
    %p85 = por %p83, %p84
    %s86 = ssub.s32 %s17, %s29
    %p87 = scmp.eq.s32.totalorder %s86, 0
    %s89 = sadd.s32 %s88, 1
    %s90 = scalar_select %p87, %s88, %s89
    %p93 = pneg %p87
    %p94 = scmp.eq.s32.totalorder %s10, 1
    %p95 = por %p93, %p94
    %p96 = scmp.ne.s32.totalorder %s88, %s91
    %p97 = scmp.eq.s32.totalorder %s10, 0
    %p98 = por %p96, %p97
    %p99 = scmp.ne.s32.totalorder %s88, %s91
    %p100 = scmp.eq.s32.totalorder %s15, 1
    %p101 = por %p99, %p100
    %p102 = scmp.ne.s32.totalorder %s91, %s92
    %p103 = scmp.eq.s32.totalorder %s15, 0
    %p104 = por %p102, %p103
    %p105 = scmp.ne.s32.totalorder %s91, %s92
    %p106 = scmp.eq.s32.totalorder %s16, 1
    %p107 = por %p105, %p106
    %p109 = scmp.ne.s32.totalorder %s92, %s108
    %p110 = scmp.eq.s32.totalorder %s16, 0
    %p111 = por %p109, %p110
    %s112 = ssub.s32 %s17, %s29
    %p113 = scmp.eq.s32.totalorder %s112, 0
    %s115 = sadd.s32 %s114, 1
    %s116 = scalar_select %p113, %s114, %s115
    %p119 = pneg %p113
    %p120 = scmp.eq.s32.totalorder %s10, 1
    %p121 = por %p119, %p120
    %p122 = scmp.ne.s32.totalorder %s114, %s117
    %p123 = scmp.eq.s32.totalorder %s10, 0
    %p124 = por %p122, %p123
    %p125 = scmp.ne.s32.totalorder %s114, %s117
    %p126 = scmp.eq.s32.totalorder %s15, 1
    %p127 = por %p125, %p126
    %p128 = scmp.ne.s32.totalorder %s117, %s118
    %p129 = scmp.eq.s32.totalorder %s15, 0
    %p130 = por %p128, %p129
    %p131 = scmp.ne.s32.totalorder %s117, %s118
    %p132 = scmp.eq.s32.totalorder %s16, 1
    %p133 = por %p131, %p132
    %p135 = scmp.ne.s32.totalorder %s118, %s134
    %p136 = scmp.eq.s32.totalorder %s16, 0
    %p137 = por %p135, %p136
    %p138 = scmp.le.s32.totalorder 1, %s10
    %p139 = scmp.lt.s32.totalorder %s10, 3
    %p140 = pnand %p138, %p139
    %p141 = pneg %p140
    // Predicated region
    $region9: #{dice_loss.1} parent=5 // pred_check
      _
    $region10: #{dice_loss.1} parent=5 // pred_check_branch
      %143 = sbr.rel (%p140) target = $region12
    $region11: #{dice_loss.1} parent=5 // pred_region
      %s144 = ssub.s32 %s10, 1
    $region12: #{dice_loss.1} parent=5 // pred_fallthru
      _
    %p145 = scmp.lt.s32.totalorder %s10, 2
    // Predicated region
    $region13: #{dice_loss.1} parent=5 // pred_check
      %p146 = pneg %p145
    $region14: #{dice_loss.1} parent=5 // pred_check_branch
      %148 = sbr.rel (%p146) target = $region16
    $region15: #{dice_loss.1} parent=5 // pred_region
      // Predicated region
      $region17: #{dice_loss.1} parent=15 // pred_check
        %p149 = pneg %p44
      $region18: #{dice_loss.1} parent=15 // pred_check_branch
        %151 = sbr.rel (%p149) target = $region20
      $region19: #{dice_loss.1} parent=15 // pred_region
        %s152 = sadd.s32 %s17, %s18
        %s153 = smul.u32 2, %s152
        %p154 = scmp.lt.s32.totalorder %s153, 3
        %s155 = scalar_select %p154, %s153, 3
        %s156 = smul.addr %s155, 8
        %s157 = scalar_lea.vmem %s0, %s156
        %s158 = sadd.s32 %s17, %s18
        %s159 = smul.u32 2, %s158
      $region20: #{dice_loss.1} parent=15 // pred_fallthru
        _
      // Predicated region
      $region21: #{dice_loss.1} parent=15 // pred_check
        %p160 = pneg %p72
      $region22: #{dice_loss.1} parent=15 // pred_check_branch
        %162 = sbr.rel (%p160) target = $region24
      $region23: #{dice_loss.1} parent=15 // pred_region
        %s163 = sadd.s32 %s17, %s18
        %s164 = smul.u32 2, %s163
        %p165 = scmp.lt.s32.totalorder %s164, 3
        %s166 = scalar_select %p165, %s164, 3
        %s167 = smul.addr %s166, 8
        %s168 = scalar_lea.vmem %s1, %s167
        %s169 = sadd.s32 %s17, %s18
        %s170 = smul.u32 2, %s169
      $region24: #{dice_loss.1} parent=15 // pred_fallthru
        _
    $region16: #{dice_loss.1} parent=5 // pred_fallthru
      _
    %p171 = scmp.le.s32.totalorder 1, %s10
    %p172 = scmp.lt.s32.totalorder %s10, 3
    %p173 = pnand %p171, %p172
    %p174 = pneg %p173
    // Predicated region
    $region25: #{dice_loss.1} parent=5 // pred_check
      _
    $region26: #{dice_loss.1} parent=5 // pred_check_branch
      %176 = sbr.rel (%p173) target = $region28
    $region27: #{dice_loss.1} parent=5 // pred_region
      %s177 = ssub.s32 %s10, 1
      %s178 = sadd.s32 %s19, %s20
      %s179 = smul.u32 2, %s178
      %p180 = scmp.lt.s32.totalorder %s179, 3
      %s181 = scalar_select %p180, %s179, 3
      %s182 = smul.addr %s181, 8
      %s183 = scalar_lea.vmem %s0, %s182
      %p184 = pneg %p50
      %p185 = pneg %p47
      %s186 = sadd.s32 %s19, %s20
      %s187 = smul.u32 2, %s186
      %p188 = scmp.lt.s32.totalorder %s187, 3
      %s189 = scalar_select %p188, %s187, 3
      %s190 = smul.addr %s189, 8
      %s191 = scalar_lea.vmem %s1, %s190
      %p192 = pneg %p78
      %p193 = pneg %p75
      %p194 = pneg %p104
      %p195 = pneg %p101
      %p196 = scmp.lt.s32.totalorder %s19, 1
      %s197 = scalar_select %p196, %s19, 1
      %s198 = smul.addr %s197, 8
      %s199 = scalar_lea.vmem %s2, %s198
      %p200 = pneg %p130
      %p201 = pneg %p127
      %p202 = scmp.lt.s32.totalorder %s19, 1
      %s203 = scalar_select %p202, %s19, 1
      %s204 = smul.addr %s203, 8
      %s205 = scalar_lea.vmem %s3, %s204
      %s206 = sadd.s32 %s19, %s20
      %s207 = smul.u32 2, %s206
      %p208 = scmp.lt.s32.totalorder %s207, 3
      %s209 = scalar_select %p208, %s207, 3
      %s210 = smul.addr %s209, 8
      %s211 = scalar_lea.vmem %s0, %s210
      %s212 = sadd.s32 %s19, %s20
      %s213 = smul.u32 2, %s212
      %s214 = sadd.s32 %s19, %s20
      %s215 = smul.u32 2, %s214
      %p216 = scmp.lt.s32.totalorder %s215, 3
      %s217 = scalar_select %p216, %s215, 3
      %s218 = smul.addr %s217, 8
      %s219 = scalar_lea.vmem %s1, %s218
      %s220 = sadd.s32 %s19, %s20
      %s221 = smul.u32 2, %s220
      %p222 = scmp.lt.s32.totalorder %s19, 1
      %s223 = scalar_select %p222, %s19, 1
      %s224 = smul.addr %s223, 8
      %s225 = scalar_lea.vmem %s2, %s224
      %p226 = scmp.lt.s32.totalorder %s19, 1
      %s227 = scalar_select %p226, %s19, 1
      %s228 = smul.addr %s227, 8
      %s229 = scalar_lea.vmem %s3, %s228
      %p230 = scmp.eq.s32.totalorder %s20, 0
      // Predicated region
      $region29: #{dice_loss.1} parent=27 // pred_check
        %p231 = pneg %p230
      $region30: #{dice_loss.1} parent=27 // pred_check_branch
        %233 = sbr.rel (%p231) target = $region32
      $region31: #{dice_loss.1} parent=27 // pred_region
        %234 = vst [vmem:[#allocation2] sm:$0xff] 0.0
        %235 = vst [vmem:[#allocation2 + $0x8] sm:$0xff] 0.0
        %236 = vst [vmem:[#allocation3] sm:$0xff] 0.0
        %237 = vst [vmem:[#allocation3 + $0x8] sm:$0xff] 0.0
      $region32: #{dice_loss.1} parent=27 // pred_fallthru
        _
      %v238 = vld [vmem:[%s211] sm:$0xff]
      %v239 = vld [vmem:[%s211 + $0x8] sm:$0xff]
      %v240 = vld [vmem:[%s219] sm:$0xff]
      %v241 = vld [vmem:[%s219 + $0x8] sm:$0xff]
      %v242 = vld [vmem:[#allocation2] sm:$0xff]
      %v243 = vld [vmem:[#allocation2 + $0x8] sm:$0xff]
      %v244 = vmul.f32 %v238, %v240
      %v245 = vmul.f32 %v239, %v241
      %v246 = vadd.f32 %v242, %v244
      %v247 = vadd.f32 %v243, %v245
      %248 = vst [vmem:[#allocation2] sm:$0xff] %v246
      %249 = vst [vmem:[#allocation2 + $0x8] sm:$0xff] %v247
      %v250 = vld [vmem:[#allocation3] sm:$0xff]
      %v251 = vld [vmem:[#allocation3 + $0x8] sm:$0xff]
      %v252 = vadd.f32 %v238, %v240
      %v253 = vadd.f32 %v239, %v241
      %v254 = vadd.f32 %v250, %v252
      %v255 = vadd.f32 %v251, %v253
      %256 = vst [vmem:[#allocation3] sm:$0xff] %v254
      %257 = vst [vmem:[#allocation3 + $0x8] sm:$0xff] %v255
      // Predicated region
      $region33: #{dice_loss.1} parent=27 // pred_check
        %p258 = pneg %p230
      $region34: #{dice_loss.1} parent=27 // pred_check_branch
        %260 = sbr.rel (%p258) target = $region36
      $region35: #{dice_loss.1} parent=27 // pred_region
        %v261 = vld [vmem:[#allocation2] sm:$0xff]
        %v262 = vld [vmem:[#allocation2 + $0x8] sm:$0xff]
        %v263 = vadd.f32 %v261, %v262
        %264 = vadd.xlane.f32.xlu0 %v263
        %v265 = vpop.xlane.xlu0 %264
        %v266 = vrot.slane %v265, 4
        %v267 = vadd.f32 %v265, %v266
        %v268 = vrot.slane %v267, 2
        %v269 = vadd.f32 %v267, %v268
        %v270 = vrot.slane %v269, 1
        %v271 = vadd.f32 %v269, %v270
        %s272 = vtos %v271
        %v273 = vstv %s272
        %v274 = vadd.f32 %v273, 0.0
        %275 = vst [vmem:[%s225] sm:$0xff] %v274
        %v276 = vld [vmem:[#allocation3] sm:$0xff]
        %v277 = vld [vmem:[#allocation3 + $0x8] sm:$0xff]
        %v278 = vadd.f32 %v276, %v277
        %279 = vadd.xlane.f32.xlu0 %v278
        %v280 = vpop.xlane.xlu0 %279
        %v281 = vrot.slane %v280, 4
        %v282 = vadd.f32 %v280, %v281
        %v283 = vrot.slane %v282, 2
        %v284 = vadd.f32 %v282, %v283
        %v285 = vrot.slane %v284, 1
        %v286 = vadd.f32 %v284, %v285
        %s287 = vtos %v286
        %v288 = vstv %s287
        %v289 = vadd.f32 %v288, 0.0
        %290 = vst [vmem:[%s229] sm:$0xff] %v289
      $region36: #{dice_loss.1} parent=27 // pred_fallthru
        _
      %p291 = scmp.lt.s32.totalorder %s19, 1
      %s292 = scalar_select %p291, %s19, 1
      %s293 = smul.addr %s292, 8
      %s294 = scalar_lea.vmem %s2, %s293
      %p295 = scmp.lt.s32.totalorder %s19, 1
      %s296 = scalar_select %p295, %s19, 1
      %s297 = smul.addr %s296, 8
      %s298 = scalar_lea.vmem %s3, %s297
      // Predicated region
      $region37: #{dice_loss.1} parent=27 // pred_check
        %p299 = pneg %p101
      $region38: #{dice_loss.1} parent=27 // pred_check_branch
        %301 = sbr.rel (%p299) target = $region40
      $region39: #{dice_loss.1} parent=27 // pred_region
        _
      $region40: #{dice_loss.1} parent=27 // pred_fallthru
        _
      // Predicated region
      $region41: #{dice_loss.1} parent=27 // pred_check
        %p302 = pneg %p127
      $region42: #{dice_loss.1} parent=27 // pred_check_branch
        %304 = sbr.rel (%p302) target = $region44
      $region43: #{dice_loss.1} parent=27 // pred_region
        _
      $region44: #{dice_loss.1} parent=27 // pred_fallthru
        _
    $region28: #{dice_loss.1} parent=5 // pred_fallthru
      _
    %p305 = scmp.le.s32.totalorder 2, %s10
    // Predicated region
    $region45: #{dice_loss.1} parent=5 // pred_check
      %p306 = pneg %p305
    $region46: #{dice_loss.1} parent=5 // pred_check_branch
      %308 = sbr.rel (%p306) target = $region48
    $region47: #{dice_loss.1} parent=5 // pred_region
      %s309 = ssub.s32 %s10, 2
      // Predicated region
      $region49: #{dice_loss.1} parent=47 // pred_check
        %p310 = pneg %p107
      $region50: #{dice_loss.1} parent=47 // pred_check_branch
        %312 = sbr.rel (%p310) target = $region52
      $region51: #{dice_loss.1} parent=47 // pred_region
        %p313 = scmp.lt.s32.totalorder %s21, 1
        %s314 = scalar_select %p313, %s21, 1
        %s315 = smul.addr %s314, 8
        %s316 = scalar_lea.vmem %s2, %s315
      $region52: #{dice_loss.1} parent=47 // pred_fallthru
        _
      // Predicated region
      $region53: #{dice_loss.1} parent=47 // pred_check
        %p317 = pneg %p133
      $region54: #{dice_loss.1} parent=47 // pred_check_branch
        %319 = sbr.rel (%p317) target = $region56
      $region55: #{dice_loss.1} parent=47 // pred_region
        %p320 = scmp.lt.s32.totalorder %s21, 1
        %s321 = scalar_select %p320, %s21, 1
        %s322 = smul.addr %s321, 8
        %s323 = scalar_lea.vmem %s3, %s322
      $region56: #{dice_loss.1} parent=47 // pred_fallthru
        _
    $region48: #{dice_loss.1} parent=5 // pred_fallthru
      _
  $region6: #{dice_loss.1} parent=0 // loop_footer
    %s14 = sadd.s32 1, %s10
  $region7: #{dice_loss.1} parent=0 // loop_footer_branch
    %9 = sbr.rel target = $region3
  $region8: #{dice_loss.1} parent=0 // loop_exit
    _

</llo_original>
